<compile_context>
chip_gen: v7x
topology: tpu7x:2x2x1
jax: 0.10.0
libtpu: 0.0.40
codegen_flags: <defaults>
</compile_context>

<pallas_src>
import functools

import jax
import jax.numpy as jnp
from jax import lax
from jax.experimental import pallas as pl
from jax.experimental.pallas import tpu as pltpu

LN_EPS = 1e-5  # torch.nn.LayerNorm default


# ------------------------------- helpers ----------------------------------

def _seq_tile(L, max_tile=512):
    """Largest power-of-two multiple of 8 (<= max_tile) dividing L, else full L."""
    t = max_tile
    while t >= 8:
        if L % t == 0:
            return t
        t //= 2
    return L


@functools.lru_cache(maxsize=None)
def _vmem_capacity():
    """Per-core VMEM capacity in bytes (conservative fallback: v7x 64 MiB)."""
    try:
        return int(pltpu.get_tpu_info().vmem_capacity_bytes)
    except Exception:
        return 64 << 20


def _compiler_params(dims):
    cap = _vmem_capacity()
    # ~100 MiB on 128-MiB chips (v5e/v6e), ~48 MiB on v7x, never below default.
    limit = int(max(32 << 20, min(cap - (16 << 20), 100 << 20)))
    return pltpu.CompilerParams(dimension_semantics=dims, vmem_limit_bytes=limit)


@functools.lru_cache(maxsize=None)
def _buffered_one_ok():
    """Probe whether pipeline_mode=pl.Buffered(1) is supported by this build."""
    try:
        def k(w_ref, x_ref, o_ref):
            o_ref[...] = x_ref[...] + w_ref[...]

        x = jnp.zeros((16, 128), jnp.float32)
        w = jnp.ones((8, 128), jnp.float32)
        out = pl.pallas_call(
            k,
            out_shape=jax.ShapeDtypeStruct((16, 128), jnp.float32),
            grid=(2,),
            in_specs=[pl.BlockSpec((8, 128), lambda i: (0, 0),
                                   pipeline_mode=pl.Buffered(1)),
                      pl.BlockSpec((8, 128), lambda i: (i, 0))],
            out_specs=pl.BlockSpec((8, 128), lambda i: (i, 0)),
        )(w, x)
        jax.block_until_ready(out)
        return bool(jnp.allclose(out, x + 1.0))
    except Exception:
        return False


def _const_spec(block_shape, index_map):
    """BlockSpec for blocks constant across the inner grid axis (weights, biases,
    LN params, resident K|V): single-buffer them to save VMEM when supported."""
    if _buffered_one_ok():
        return pl.BlockSpec(block_shape, index_map, pipeline_mode=pl.Buffered(1))
    return pl.BlockSpec(block_shape, index_map)


def _layernorm(z, g, b):
    mu = jnp.mean(z, axis=-1, keepdims=True)
    zc = z - mu
    var = jnp.mean(zc * zc, axis=-1, keepdims=True)
    zn = zc * lax.rsqrt(var + LN_EPS)
    return zn * g + b


def _attn_q_tile(L, D, n_heads, attn_bytes, has_mask):
    """Chip-aware Q-tile size for the attention kernel (fits the VMEM budget)."""
    budget = int(0.55 * _vmem_capacity())
    tq = _seq_tile(L, 512)
    kv_bufs = 1 if _buffered_one_ok() else 2
    base = L * 2 * D * 4 * kv_bufs + 2 * D * D  # resident K|V (+ bf16 Wo)
    while True:
        per_q = tq * D * 4 * 2 * 2                       # q tile + residual, dbl-buffered
        out_x = tq * D * 4 * 2
        attn_out = n_heads * tq * L * attn_bytes * 2
        mask_b = (tq * L * 4 * 2) if has_mask else 0
        if base + per_q + out_x + attn_out + mask_b <= budget:
            break
        if tq <= 8 or L % (tq // 2) != 0:
            break
        tq //= 2
    return tq


# ----------------------------- Pallas kernels -----------------------------

def qkv_proj_kernel(x_ref, wq_ref, bq_ref, wkv_ref, bkv_ref, q_ref, kv_ref):
    # x_ref: (TL, D) f32; wq: (D, D) bf16; wkv: (D, 2D) bf16; biases f32.
    x = x_ref[...].astype(jnp.bfloat16)
    q = jnp.dot(x, wq_ref[...], preferred_element_type=jnp.float32) + bq_ref[...]
    kv = jnp.dot(x, wkv_ref[...], preferred_element_type=jnp.float32) + bkv_ref[...]
    q_ref[...] = q.astype(q_ref.dtype)
    kv_ref[...] = kv.astype(kv_ref.dtype)


def attn_proj_ln_kernel(*refs, n_heads, scale, has_mask, output_attention):
    # Fused: per-head attention -> per-head output-projection accumulate
    #        -> +residual -> LayerNorm1.
    i = 0
    q_ref = refs[i]; i += 1               # (TQ, D)
    kv_ref = refs[i]; i += 1              # (L, 2D) resident K|V
    mask_ref = None
    if has_mask:
        mask_ref = refs[i]; i += 1        # (TQ, L) additive float mask
    x_ref, wo_ref, bo_ref, g_ref, bln_ref = refs[i:i + 5]; i += 5
    x1_ref = refs[i]; i += 1
    attn_ref = refs[i] if output_attention else None

    D = x_ref.shape[-1]
    dh = D // n_heads
    TQ = q_ref.shape[0]

    q_all = q_ref[...].astype(jnp.bfloat16)
    kv = kv_ref[...]
    k_all = kv[:, :D].astype(jnp.bfloat16)
    v_all = kv[:, D:].astype(jnp.bfloat16)
    mask = mask_ref[...].astype(jnp.float32) if has_mask else None
    wo = wo_ref[...]                                  # (D, D) bf16 (pre-cast)

    # Phase 1: all per-head score matmuls back-to-back (keeps MXU busy, no
    # softmax VPU/EUP work interleaved between pushes).
    scores = []
    for h in range(n_heads):
        q = q_all[:, h * dh:(h + 1) * dh]
        k = k_all[:, h * dh:(h + 1) * dh]
        s = lax.dot_general(q, k, (((1,), (1,)), ((), ())),
                            preferred_element_type=jnp.float32) * scale
        if mask is not None:
            s = s + mask
        scores.append(s)

    # Phase 2: softmax + PV + per-head Wo accumulation (no concat / lane repack).
    acc = jnp.zeros((TQ, D), jnp.float32)
    for h in range(n_heads):
        s = scores[h]
        s = s - jnp.max(s, axis=-1, keepdims=True)
        p = jnp.exp(s)
        # approx reciprocal runs on the EUP slot; rows sum to ~1 (tiny deviation
        # vs. the exact PyTorch softmax — acceptable for inference).
        p = p * pl.reciprocal(jnp.sum(p, axis=-1, keepdims=True), approx=True)
        if attn_ref is not None:
            attn_ref[h, :, :] = p.astype(attn_ref.dtype)
        v = v_all[:, h * dh:(h + 1) * dh]
        ctx_h = jnp.dot(p.astype(jnp.bfloat16), v,
                        preferred_element_type=jnp.float32)          # (TQ, dh)
        acc = acc + jnp.dot(ctx_h.astype(jnp.bfloat16),
                            wo[h * dh:(h + 1) * dh, :],
                            preferred_element_type=jnp.float32)      # (TQ, D)

    y = acc + bo_ref[...]
    z = x_ref[...].astype(jnp.float32) + y
    x1_ref[...] = _layernorm(z, g_ref[...], bln_ref[...]).astype(x1_ref.dtype)


def ffn_ln_kernel(*refs, apply_final_ln):
    # Fused position-wise FFN (Conv1d k=1) -> +residual -> LayerNorm
    # (optionally followed by the encoder's final LayerNorm on the last layer).
    if apply_final_ln:
        (x_ref, w1_ref, b1_ref, w2_ref, b2_ref,
         g_ref, bln_ref, g2_ref, b2ln_ref, o_ref) = refs
    else:
        (x_ref, w1_ref, b1_ref, w2_ref, b2_ref,
         g_ref, bln_ref, o_ref) = refs
        g2_ref = b2ln_ref = None

    x = x_ref[...]
    h = jnp.dot(x.astype(jnp.bfloat16), w1_ref[...],
                preferred_element_type=jnp.float32) + b1_ref[...]
    h = jnp.maximum(h, 0.0)  # ReLU
    y = jnp.dot(h.astype(jnp.bfloat16), w2_ref[...],
                preferred_element_type=jnp.float32) + b2_ref[...]
    z = x.astype(jnp.float32) + y
    out = _layernorm(z, g_ref[...], bln_ref[...])
    if apply_final_ln:
        out = _layernorm(out, g2_ref[...], b2ln_ref[...])
    o_ref[...] = out.astype(o_ref.dtype)


# ----------------------------- Pallas wrappers -----------------------------

def pallas_qkv_proj(x, wq, bq, wkv, bkv):
    """q = x @ wq + bq ; kv = x @ wkv + bkv, tiled over (B, L)."""
    B, L, D = x.shape
    TL = _seq_tile(L)
    return pl.pallas_call(
        qkv_proj_kernel,
        out_shape=(jax.ShapeDtypeStruct((B, L, D), x.dtype),
                   jax.ShapeDtypeStruct((B, L, 2 * D), x.dtype)),
        grid=(B, L // TL),
        in_specs=[pl.BlockSpec((None, TL, D), lambda bi, li: (bi, li, 0)),
                  _const_spec((D, D), lambda bi, li: (0, 0)),
                  _const_spec((1, D), lambda bi, li: (0, 0)),
                  _const_spec((D, 2 * D), lambda bi, li: (0, 0)),
                  _const_spec((1, 2 * D), lambda bi, li: (0, 0))],
        out_specs=(pl.BlockSpec((None, TL, D), lambda bi, li: (bi, li, 0)),
                   pl.BlockSpec((None, TL, 2 * D), lambda bi, li: (bi, li, 0))),
        compiler_params=_compiler_params(("parallel", "parallel")),
    )(x, wq, bq, wkv, bkv)


def pallas_attention_block(q, kv, x, wo, bo, ln_g, ln_b, n_heads,
                           attn_mask=None, output_attention=True,
                           attn_dtype=jnp.bfloat16):
    """Fused attention + output projection + residual + LayerNorm.

    q : (B, L, D) queries; kv : (B, L, 2D) fused keys|values (resident per batch);
    x : (B, L, D) residual input.  Returns (x1, attn) with attn (B,H,L,L) or None.
    """
    B, L, D = x.shape
    dh = D // n_heads
    scale = 1.0 / float(dh) ** 0.5
    has_mask = attn_mask is not None
    attn_bytes = jnp.dtype(attn_dtype).itemsize if output_attention else 0
    TQ = _attn_q_tile(L, D, n_heads, attn_bytes, has_mask)

    in_specs = [
        pl.BlockSpec((None, TQ, D), lambda bi, qi: (bi, qi, 0)),    # Q tile
        _const_spec((None, L, 2 * D), lambda bi, qi: (bi, 0, 0)),   # resident K|V
    ]
    args = [q, kv]
    if has_mask:
        in_specs.append(pl.BlockSpec((None, TQ, L), lambda bi, qi: (bi, qi, 0)))
        args.append(attn_mask.astype(jnp.float32))
    in_specs += [
        pl.BlockSpec((None, TQ, D), lambda bi, qi: (bi, qi, 0)),    # residual x
        _const_spec((D, D), lambda bi, qi: (0, 0)),                 # wo (bf16)
        _const_spec((1, D), lambda bi, qi: (0, 0)),                 # bo
        _const_spec((1, D), lambda bi, qi: (0, 0)),                 # ln gamma
        _const_spec((1, D), lambda bi, qi: (0, 0)),                 # ln beta
    ]
    args += [x, wo, bo, ln_g, ln_b]

    if output_attention:
        out_shape = (jax.ShapeDtypeStruct((B, L, D), x.dtype),
                     jax.ShapeDtypeStruct((B, n_heads, L, L), attn_dtype))
        out_specs = (pl.BlockSpec((None, TQ, D), lambda bi, qi: (bi, qi, 0)),
                     pl.BlockSpec((None, n_heads, TQ, L),
                                  lambda bi, qi: (bi, 0, qi, 0)))
    else:
        out_shape = jax.ShapeDtypeStruct((B, L, D), x.dtype)
        out_specs = pl.BlockSpec((None, TQ, D), lambda bi, qi: (bi, qi, 0))

    kern = functools.partial(attn_proj_ln_kernel, n_heads=n_heads, scale=scale,
                             has_mask=has_mask, output_attention=output_attention)
    outs = pl.pallas_call(
        kern,
        out_shape=out_shape,
        grid=(B, L // TQ),
        in_specs=in_specs,
        out_specs=out_specs,
        # qi axis "arbitrary": megacore splits on B only, so the resident K|V
        # block is never duplicated across TensorCores (important on v7x).
        compiler_params=_compiler_params(("parallel", "arbitrary")),
    )(*args)
    # TODO(synk): for very long L with output_attention=False, a KV-tiled
    # flash-style online-softmax loop would remove the O(L) resident KV block.
    if output_attention:
        return outs[0], outs[1]
    return outs, None


def pallas_ffn_block(x, w1, b1, w2, b2, ln_g, ln_b, final_ln=None):
    """Fused FFN + residual + LayerNorm (+ optional final encoder LayerNorm)."""
    B, L, D = x.shape
    Dff = w1.shape[1]
    TL = _seq_tile(L)
    apply_final_ln = final_ln is not None
    in_specs = [pl.BlockSpec((None, TL, D), lambda bi, li: (bi, li, 0)),
                _const_spec((D, Dff), lambda bi, li: (0, 0)),
                _const_spec((1, Dff), lambda bi, li: (0, 0)),
                _const_spec((Dff, D), lambda bi, li: (0, 0)),
                _const_spec((1, D), lambda bi, li: (0, 0)),
                _const_spec((1, D), lambda bi, li: (0, 0)),
                _const_spec((1, D), lambda bi, li: (0, 0))]
    args = [x, w1, b1, w2, b2, ln_g, ln_b]
    if apply_final_ln:
        in_specs += [_const_spec((1, D), lambda bi, li: (0, 0)),
                     _const_spec((1, D), lambda bi, li: (0, 0))]
        args += [final_ln[0], final_ln[1]]
    return pl.pallas_call(
        functools.partial(ffn_ln_kernel, apply_final_ln=apply_final_ln),
        out_shape=jax.ShapeDtypeStruct((B, L, D), x.dtype),
        grid=(B, L // TL),
        in_specs=in_specs,
        out_specs=pl.BlockSpec((None, TL, D), lambda bi, li: (bi, li, 0)),
        compiler_params=_compiler_params(("parallel", "parallel")),
    )(*args)


# --------------------------- model construction ---------------------------

def init_params(key, n_layers, d_model, d_ff):
    # Weights stored directly in bf16 (MXU inputs); biases / LN params stay f32
    # (they are added to f32 accumulators).
    def dense(k, din, dout):
        w = (0.02 * jax.random.normal(k, (din, dout), jnp.float32)).astype(jnp.bfloat16)
        b = jnp.zeros((1, dout), jnp.float32)
        return w, b

    layers = []
    for _ in range(n_layers):
        keys = jax.random.split(key, 6)
        key = keys[0]
        w_q, b_q = dense(keys[1], d_model, d_model)
        w_kv, b_kv = dense(keys[2], d_model, 2 * d_model)     # fused K|V weight
        wo, bo = dense(keys[3], d_model, d_model)
        w1, b1 = dense(keys[4], d_model, d_ff)
        w2, b2 = dense(keys[5], d_ff, d_model)
        layers.append(dict(
            w_q=w_q, b_q=b_q, w_kv=w_kv, b_kv=b_kv, wo=wo, bo=bo,
            w1=w1, b1=b1, w2=w2, b2=b2,
            ln1_g=jnp.ones((1, d_model), jnp.float32),
            ln1_b=jnp.zeros((1, d_model), jnp.float32),
            ln2_g=jnp.ones((1, d_model), jnp.float32),
            ln2_b=jnp.zeros((1, d_model), jnp.float32),
        ))
    return dict(layers=layers,
                norm_g=jnp.ones((1, d_model), jnp.float32),
                norm_b=jnp.zeros((1, d_model), jnp.float32))


def encoder_layer(x, p, n_heads, attn_mask=None, output_attention=True,
                  final_ln=None):
    # 1) fused Q / KV projections (x read once, two matmuls)
    q, kv = pallas_qkv_proj(x, p["w_q"], p["b_q"], p["w_kv"], p["b_kv"])
    # 2) fused attention + Wo projection + residual + LayerNorm1
    x1, attn = pallas_attention_block(q, kv, x, p["wo"], p["bo"],
                                      p["ln1_g"], p["ln1_b"], n_heads,
                                      attn_mask=attn_mask,
                                      output_attention=output_attention)
    # 3) fused FFN + residual + LayerNorm2 (+ final encoder LN on the last layer;
    #    dropout = identity in eval mode)
    out = pallas_ffn_block(x1, p["w1"], p["b1"], p["w2"], p["b2"],
                           p["ln2_g"], p["ln2_b"], final_ln=final_ln)
    # TODO(synk): Deformer's omegas/thetas penalties come from the deformable
    # sampling offsets of the concrete attention layer, which is not part of
    # this Encoder module; returned as scalar zeros.
    omegas_penalty = jnp.float32(0.0)
    thetas_penalty = jnp.float32(0.0)
    return out, attn, omegas_penalty, thetas_penalty


def encoder_forward(x, params, n_heads, attn_mask=None, output_attention=True):
    """Mirrors Encoder.forward with conv_layers=None and norm_layer=LayerNorm.

    attn_mask, if given, is an additive float mask of shape (B, L, L) applied
    to the attention scores (broadcast over heads).
    """
    attns = []
    omegas_penalties = []
    thetas_penalties = []
    layers = params["layers"]
    n = len(layers)
    for idx, p in enumerate(layers):
        final_ln = (params["norm_g"], params["norm_b"]) if idx == n - 1 else None
        x, attn, omegas_penalty, thetas_penalty = encoder_layer(
            x, p, n_heads, attn_mask,
            output_attention=output_attention, final_ln=final_ln)
        attns.append(attn)
        omegas_penalties.append(omegas_penalty)
        omegas_penalties.append(thetas_penalty)  # reproduces the original append pattern
    return x, attns, omegas_penalties, thetas_penalties


# ----------------------------------- main -----------------------------------

if __name__ == "__main__":
    B, L, D = 2, 8, 32
    n_heads, d_ff, n_layers = 4, 64, 2

    key = jax.random.PRNGKey(0)
    k_x, k_p = jax.random.split(key)
    x = jax.random.normal(k_x, (B, L, D), jnp.float32)
    params = init_params(k_p, n_layers, D, d_ff)

    out, attns, omegas_penalties, thetas_penalties = encoder_forward(
        x, params, n_heads)

    jax.block_until_ready(out)
    for a in attns:
        jax.block_until_ready(a)

    assert out.shape == (B, L, D)
    assert all(a.shape == (B, n_heads, L, L) for a in attns)
    assert len(attns) == n_layers
    assert len(omegas_penalties) == 2 * n_layers
    assert len(thetas_penalties) == 0  # matches original code (never appended to)
    assert bool(jnp.all(jnp.isfinite(out)))

    print("KERNEL_OK")
</pallas_src>

<mosaic_0001>
module attributes {stable_mosaic.version = 11 : i64} {
  func.func @k(%arg0: i32, %arg1: memref<8x128xf32, #tpu.memory_space<vmem>>, %arg2: memref<8x128xf32, #tpu.memory_space<vmem>>, %arg3: memref<8x128xf32, #tpu.memory_space<vmem>>) attributes {dimension_semantics = [#tpu.dimension_semantics<arbitrary>], iteration_bounds = array<i64: 2>, scalar_prefetch = 0 : i64, scratch_operands = 0 : i64, tpu.core_type = #tpu.core_type<tc>, window_params = [{pipeline_mode = #tpu.pipeline_mode<synchronous>, transform_indices = @transform_0, window_bounds = array<i64: 8, 128>}, {transform_indices = @transform_1, window_bounds = array<i64: 8, 128>}, {transform_indices = @transform_2, window_bounds = array<i64: 8, 128>}]} {
    %c0 = arith.constant 0 : index
    %c0_0 = arith.constant 0 : index
    %0 = vector.load %arg2[%c0, %c0_0] : memref<8x128xf32, #tpu.memory_space<vmem>>, vector<8x128xf32>
    %c0_1 = arith.constant 0 : index
    %c0_2 = arith.constant 0 : index
    %1 = vector.load %arg1[%c0_1, %c0_2] : memref<8x128xf32, #tpu.memory_space<vmem>>, vector<8x128xf32>
    %2 = arith.addf %0, %1 : vector<8x128xf32>
    %c0_3 = arith.constant 0 : index
    %c0_4 = arith.constant 0 : index
    %3 = vector.load %arg3[%c0_3, %c0_4] : memref<8x128xf32, #tpu.memory_space<vmem>>, vector<8x128xf32>
    tpu.vector_store %arg3[%c0_3, %c0_4], %2 {strides = array<i32>} : memref<8x128xf32, #tpu.memory_space<vmem>>, vector<8x128xf32>,
    return
  }
  func.func @transform_0(%arg0: i32) -> (i32, i32) {
    %c0_i32 = arith.constant 0 : i32
    %c0_i32_0 = arith.constant 0 : i32
    %c0_i32_1 = arith.constant 0 : i32
    return %c0_i32, %c0_i32_0 : i32, i32
  }
  func.func @transform_1(%arg0: i32) -> (i32, i32) {
    %c0_i32 = arith.constant 0 : i32
    %c0_i32_0 = arith.constant 0 : i32
    return %arg0, %c0_i32 : i32, i32
  }
  func.func @transform_2(%arg0: i32) -> (i32, i32) {
    %c0_i32 = arith.constant 0 : i32
    %c0_i32_0 = arith.constant 0 : i32
    return %arg0, %c0_i32 : i32, i32
  }
}

module attributes {stable_mosaic.version = 11 : i64} {
  func.func @qkv_proj_kernel(%arg0: i32, %arg1: i32, %arg2: memref<1x8x32xf32, #tpu.memory_space<vmem>>, %arg3: memref<32x32xbf16, #tpu.memory_space<vmem>>, %arg4: memref<1x32xf32, #tpu.memory_space<vmem>>, %arg5: memref<32x64xbf16, #tpu.memory_space<vmem>>, %arg6: memref<1x64xf32, #tpu.memory_space<vmem>>, %arg7: memref<1x8x32xf32, #tpu.memory_space<vmem>>, %arg8: memref<1x8x64xf32, #tpu.memory_space<vmem>>) attributes {dimension_semantics = [#tpu.dimension_semantics<parallel>, #tpu.dimension_semantics<parallel>], iteration_bounds = array<i64: 2, 1>, scalar_prefetch = 0 : i64, scratch_operands = 0 : i64, tpu.core_type = #tpu.core_type<tc>, window_params = [{transform_indices = @transform_0, window_bounds = array<i64: 1, 8, 32>}, {pipeline_mode = #tpu.pipeline_mode<synchronous>, transform_indices = @transform_1, window_bounds = array<i64: 32, 32>}, {pipeline_mode = #tpu.pipeline_mode<synchronous>, transform_indices = @transform_2, window_bounds = array<i64: 1, 32>}, {pipeline_mode = #tpu.pipeline_mode<synchronous>, transform_indices = @transform_3, window_bounds = array<i64: 32, 64>}, {pipeline_mode = #tpu.pipeline_mode<synchronous>, transform_indices = @transform_4, window_bounds = array<i64: 1, 64>}, {transform_indices = @transform_5, window_bounds = array<i64: 1, 8, 32>}, {transform_indices = @transform_6, window_bounds = array<i64: 1, 8, 64>}]} {
    %c0 = arith.constant 0 : index
    %c0_0 = arith.constant 0 : index
    %c0_1 = arith.constant 0 : index
    %0 = vector.load %arg2[%c0, %c0_0, %c0_1] : memref<1x8x32xf32, #tpu.memory_space<vmem>>, vector<1x8x32xf32>
    %1 = vector.shape_cast %0 : vector<1x8x32xf32> to vector<8x32xf32>
    %2 = arith.truncf %1 : vector<8x32xf32> to vector<8x32xbf16>
    %c0_2 = arith.constant 0 : index
    %c0_3 = arith.constant 0 : index
    %3 = vector.load %arg3[%c0_2, %c0_3] : memref<32x32xbf16, #tpu.memory_space<vmem>>, vector<32x32xbf16>
    %cst = arith.constant dense<0.000000e+00> : vector<8x32xf32>
    %4 = tpu.matmul %2, %3, %cst {dimension_numbers = #tpu.dot_dimension_numbers<[1], [0], [0], [1], [0, 0, 1, 1], [], []>} : vector<8x32xbf16>, vector<32x32xbf16>, vector<8x32xf32> -> vector<8x32xf32>
    %c0_4 = arith.constant 0 : index
    %c0_5 = arith.constant 0 : index
    %5 = vector.load %arg4[%c0_4, %c0_5] : memref<1x32xf32, #tpu.memory_space<vmem>>, vector<1x32xf32>
    %6 = vector.broadcast %5 : vector<1x32xf32> to vector<8x32xf32>
    %7 = arith.addf %4, %6 : vector<8x32xf32>
    %c0_6 = arith.constant 0 : index
    %c0_7 = arith.constant 0 : index
    %8 = vector.load %arg5[%c0_6, %c0_7] : memref<32x64xbf16, #tpu.memory_space<vmem>>, vector<32x64xbf16>
    %cst_8 = arith.constant dense<0.000000e+00> : vector<8x64xf32>
    %9 = tpu.matmul %2, %8, %cst_8 {dimension_numbers = #tpu.dot_dimension_numbers<[1], [0], [0], [1], [0, 0, 1, 1], [], []>} : vector<8x32xbf16>, vector<32x64xbf16>, vector<8x64xf32> -> vector<8x64xf32>
    %c0_9 = arith.constant 0 : index
    %c0_10 = arith.constant 0 : index
    %10 = vector.load %arg6[%c0_9, %c0_10] : memref<1x64xf32, #tpu.memory_space<vmem>>, vector<1x64xf32>
    %11 = vector.broadcast %10 : vector<1x64xf32> to vector<8x64xf32>
    %12 = arith.addf %9, %11 : vector<8x64xf32>
    %c0_11 = arith.constant 0 : index
    %c0_12 = arith.constant 0 : index
    %c0_13 = arith.constant 0 : index
    %13 = vector.load %arg7[%c0_11, %c0_12, %c0_13] : memref<1x8x32xf32, #tpu.memory_space<vmem>>, vector<1x8x32xf32>
    %14 = vector.shape_cast %13 : vector<1x8x32xf32> to vector<8x32xf32>
    %15 = vector.shape_cast %7 : vector<8x32xf32> to vector<1x8x32xf32>
    tpu.vector_store %arg7[%c0_11, %c0_12, %c0_13], %15 {strides = array<i32>} : memref<1x8x32xf32, #tpu.memory_space<vmem>>, vector<1x8x32xf32>,
    %c0_14 = arith.constant 0 : index
    %c0_15 = arith.constant 0 : index
    %c0_16 = arith.constant 0 : index
    %16 = vector.load %arg8[%c0_14, %c0_15, %c0_16] : memref<1x8x64xf32, #tpu.memory_space<vmem>>, vector<1x8x64xf32>
    %17 = vector.shape_cast %16 : vector<1x8x64xf32> to vector<8x64xf32>
    %18 = vector.shape_cast %12 : vector<8x64xf32> to vector<1x8x64xf32>
    tpu.vector_store %arg8[%c0_14, %c0_15, %c0_16], %18 {strides = array<i32>} : memref<1x8x64xf32, #tpu.memory_space<vmem>>, vector<1x8x64xf32>,
    return
  }
  func.func @transform_0(%arg0: i32, %arg1: i32) -> (i32, i32, i32) {
    %c0_i32 = arith.constant 0 : i32
    %c0_i32_0 = arith.constant 0 : i32
    return %arg0, %arg1, %c0_i32 : i32, i32, i32
  }
  func.func @transform_1(%arg0: i32, %arg1: i32) -> (i32, i32) {
    %c0_i32 = arith.constant 0 : i32
    %c0_i32_0 = arith.constant 0 : i32
    %c0_i32_1 = arith.constant 0 : i32
    return %c0_i32, %c0_i32_0 : i32, i32
  }
  func.func @transform_2(%arg0: i32, %arg1: i32) -> (i32, i32) {
    %c0_i32 = arith.constant 0 : i32
    %c0_i32_0 = arith.constant 0 : i32
    %c0_i32_1 = arith.constant 0 : i32
    return %c0_i32, %c0_i32_0 : i32, i32
  }
  func.func @transform_3(%arg0: i32, %arg1: i32) -> (i32, i32) {
    %c0_i32 = arith.constant 0 : i32
    %c0_i32_0 = arith.constant 0 : i32
    %c0_i32_1 = arith.constant 0 : i32
    return %c0_i32, %c0_i32_0 : i32, i32
  }
  func.func @transform_4(%arg0: i32, %arg1: i32) -> (i32, i32) {
    %c0_i32 = arith.constant 0 : i32
    %c0_i32_0 = arith.constant 0 : i32
    %c0_i32_1 = arith.constant 0 : i32
    return %c0_i32, %c0_i32_0 : i32, i32
  }
  func.func @transform_5(%arg0: i32, %arg1: i32) -> (i32, i32, i32) {
    %c0_i32 = arith.constant 0 : i32
    %c0_i32_0 = arith.constant 0 : i32
    return %arg0, %arg1, %c0_i32 : i32, i32, i32
  }
  func.func @transform_6(%arg0: i32, %arg1: i32) -> (i32, i32, i32) {
    %c0_i32 = arith.constant 0 : i32
    %c0_i32_0 = arith.constant 0 : i32
    return %arg0, %arg1, %c0_i32 : i32, i32, i32
  }
}

</mosaic_0001>

<llo_original>
// kernel: tpu_custom_call.1
$region0: #{tpu_custom_call.1}
  #allocation0 [shape = 'u32[]', space=smem, size = 0x4, offset = 0x4, fixed_abs, tag = 'smem constant byte address 0x4 - core index']
  #allocation1 [shape = 'u32[144,128]{1,0:T(1,128)}', space=vmem, size = 0x12000, scoped, tag = 'internal scratch']
  %s0 = inlined_call_operand.hbm [shape: f32[8,128], index: 0, kind: input, shape index: {}]
  %s1 = inlined_call_operand.hbm [shape: f32[16,128], index: 1, kind: input, shape index: {}]
  %s2 = inlined_call_operand.hbm [shape: f32[16,128], index: 2, kind: output, shape index: {}]
  %s3 = sld [smem:[#allocation0]]
  $region49: #{tpu_custom_call.1} parent=0
    _
  %s5 = ssub.s32 1, %s3
  %s6 = scalar_select 0, %s5, %s3
  $region1: #{tpu_custom_call.1} parent=0
    #allocation2 [shape = 'u8[4096]{0}', space=vmem, size = 0x1000, scoped, tag = 'input window, operand 0, single buffered']
    #allocation3 [shape = 's32[2]{0}', space=sflag, size = 0x8, scoped, tag = 'scoped memory for tpu_custom_call.1']
    #allocation4 [shape = 's32[2]{0}', space=sflag, size = 0x8, scoped, tag = 'scoped memory for tpu_custom_call.1']
    #allocation5 [shape = 'u8[8192]{0}', space=vmem, size = 0x2000, scoped, tag = 'input window, operand 1']
    #allocation6 [shape = 's32[2]{0}', space=sflag, size = 0x8, scoped, tag = 'scoped memory for tpu_custom_call.1']
    #allocation7 [shape = 'u8[8192]{0}', space=vmem, size = 0x2000, scoped, tag = 'output window, operand 0']
    %7 = vsyncpa [#allocation3], 0
    %8 = vsyncpa [#allocation6], 0
    %s9 = scalar_lea.sflag [#allocation6], 1
    %10 = vsyncpa %s9, 0
    %11 = vsyncpa [#allocation4], 0
    %s12 = scalar_lea.sflag [#allocation4], 1
    %13 = vsyncpa %s12, 0
    loop: start=0, step=1, limit=4
    $region2: #{tpu_custom_call.1} parent=1 // loop_pre_header
      _
    $region3: #{tpu_custom_call.1} parent=1 // loop_header
      %s15 = sphi 0, %s19
      %p16 = scmp.ge.s32.totalorder %s15, 4
      %s23 = sphi 0, %s23
      %s25 = sphi 0, %s23
      %s26 = sphi 0, %s25
      %s40 = sphi 0, %s26
      %s46 = sphi 0, %s48
      %s49 = sphi 0, %s46
      %s50 = sphi 0, %s49
      %s66 = sphi 0, %s50
      %s72 = sphi 0, %s74
      %s75 = sphi 0, %s72
      %s76 = sphi 0, %s75
      %s92 = sphi 0, %s76
    $region4: #{tpu_custom_call.1} parent=1 // loop_header_branch
      %18 = sbr.rel (%p16) target = $region8
    $region5: #{tpu_custom_call.1} parent=1 // loop_body
      %s20 = ssub.s32 %s15, 1
      %s21 = ssub.s32 %s15, 2
      %s22 = sadd.s32 %s15, 1
      %s24 = sadd.s32 %s23, 1
      %p27 = scmp.eq.s32.totalorder %s15, 1
      %p28 = scmp.ne.s32.totalorder %s23, %s25
      %p29 = scmp.eq.s32.totalorder %s15, 0
      %p30 = por %p28, %p29
      %p31 = scmp.ne.s32.totalorder %s23, %s25
      %p32 = scmp.eq.s32.totalorder %s20, 1
      %p33 = por %p31, %p32
      %p34 = scmp.ne.s32.totalorder %s25, %s26
      %p35 = scmp.eq.s32.totalorder %s20, 0
      %p36 = por %p34, %p35
      %p37 = scmp.ne.s32.totalorder %s25, %s26
      %p38 = scmp.eq.s32.totalorder %s21, 1
      %p39 = por %p37, %p38
      %p41 = scmp.ne.s32.totalorder %s26, %s40
      %p42 = scmp.eq.s32.totalorder %s21, 0
      %p43 = por %p41, %p42
      %s44 = ssub.s32 %s15, %s22
      %p45 = scmp.eq.s32.totalorder %s44, 0
      %s47 = sadd.s32 %s46, 1
      %s48 = scalar_select %p45, %s46, %s47
      %p51 = pneg %p45
      %p52 = scmp.eq.s32.totalorder %s15, 1
      %p53 = por %p51, %p52
      %p54 = scmp.ne.s32.totalorder %s46, %s49
      %p55 = scmp.eq.s32.totalorder %s15, 0
      %p56 = por %p54, %p55
      %p57 = scmp.ne.s32.totalorder %s46, %s49
      %p58 = scmp.eq.s32.totalorder %s20, 1
      %p59 = por %p57, %p58
      %p60 = scmp.ne.s32.totalorder %s49, %s50
      %p61 = scmp.eq.s32.totalorder %s20, 0
      %p62 = por %p60, %p61
      %p63 = scmp.ne.s32.totalorder %s49, %s50
      %p64 = scmp.eq.s32.totalorder %s21, 1
      %p65 = por %p63, %p64
      %p67 = scmp.ne.s32.totalorder %s50, %s66
      %p68 = scmp.eq.s32.totalorder %s21, 0
      %p69 = por %p67, %p68
      %s70 = ssub.s32 %s15, %s22
      %p71 = scmp.eq.s32.totalorder %s70, 0
      %s73 = sadd.s32 %s72, 1
      %s74 = scalar_select %p71, %s72, %s73
      %p77 = pneg %p71
      %p78 = scmp.eq.s32.totalorder %s15, 1
      %p79 = por %p77, %p78
      %p80 = scmp.ne.s32.totalorder %s72, %s75
      %p81 = scmp.eq.s32.totalorder %s15, 0
      %p82 = por %p80, %p81
      %p83 = scmp.ne.s32.totalorder %s72, %s75
      %p84 = scmp.eq.s32.totalorder %s20, 1
      %p85 = por %p83, %p84
      %p86 = scmp.ne.s32.totalorder %s75, %s76
      %p87 = scmp.eq.s32.totalorder %s20, 0
      %p88 = por %p86, %p87
      %p89 = scmp.ne.s32.totalorder %s75, %s76
      %p90 = scmp.eq.s32.totalorder %s21, 1
      %p91 = por %p89, %p90
      %p93 = scmp.ne.s32.totalorder %s76, %s92
      %p94 = scmp.eq.s32.totalorder %s21, 0
      %p95 = por %p93, %p94
      %p96 = scmp.le.s32.totalorder 1, %s15
      %p97 = scmp.lt.s32.totalorder %s15, 3
      %p98 = pnand %p96, %p97
      %p99 = pneg %p98
      // Predicated region
      $region9: #{tpu_custom_call.1} parent=5 // pred_check
        _
      $region10: #{tpu_custom_call.1} parent=5 // pred_check_branch
        %101 = sbr.rel (%p98) target = $region12
      $region11: #{tpu_custom_call.1} parent=5 // pred_region
        %s102 = ssub.s32 %s15, 1
        // Predicated region
        $region13: #{tpu_custom_call.1} parent=11 // pred_check
          %p103 = pneg %p36
        $region14: #{tpu_custom_call.1} parent=11 // pred_check_branch
          %105 = sbr.rel (%p103) target = $region16
        $region15: #{tpu_custom_call.1} parent=11 // pred_region
          %s107 = ssub.s32 128, 128
          %108 = vsyncadd [#allocation3], %s107
          %s110 = sshll.u32 [#allocation2], 4
          %s111 = int_to_ptr.vmem [resolvable:$true] %s110
          %113 = dma.hbm_to_vmem [thread:$0]  %s0, 128, %s111, [#allocation3]
        $region16: #{tpu_custom_call.1} parent=11 // pred_fallthru
          _
      $region12: #{tpu_custom_call.1} parent=5 // pred_fallthru
        _
      %p114 = scmp.lt.s32.totalorder %s15, 2
      // Predicated region
      $region17: #{tpu_custom_call.1} parent=5 // pred_check
        %p115 = pneg %p114
      $region18: #{tpu_custom_call.1} parent=5 // pred_check_branch
        %117 = sbr.rel (%p115) target = $region20
      $region19: #{tpu_custom_call.1} parent=5 // pred_region
        // Predicated region
        $region21: #{tpu_custom_call.1} parent=19 // pred_check
          %p118 = pneg %p56
        $region22: #{tpu_custom_call.1} parent=19 // pred_check_branch
          %120 = sbr.rel (%p118) target = $region24
        $region23: #{tpu_custom_call.1} parent=19 // pred_region
          %s121 = sand.u32 %s46, 1
          %s122 = scalar_lea.sflag [#allocation6], %s121
          %s123 = sand.u32 %s46, 1
          %s124 = smul.addr %s123, 8
          %s125 = scalar_lea.vmem [#allocation5], %s124
          %s127 = ssub.s32 128, 128
          %128 = vsyncadd %s122, %s127
          %s129 = smul.addr %s15, 128
          %s130 = scalar_lea.hbm %s1, %s129
          %s132 = sshll.u32 %s125, 4
          %s133 = int_to_ptr.vmem [resolvable:$true] %s132
          %135 = dma.hbm_to_vmem [thread:$0]  %s130, 128, %s133, %s122
        $region24: #{tpu_custom_call.1} parent=19 // pred_fallthru
          _
      $region20: #{tpu_custom_call.1} parent=5 // pred_fallthru
        _
      %p136 = scmp.le.s32.totalorder 1, %s15
      %p137 = scmp.lt.s32.totalorder %s15, 3
      %p138 = pnand %p136, %p137
      %p139 = pneg %p138
      // Predicated region
      $region25: #{tpu_custom_call.1} parent=5 // pred_check
        _
      $region26: #{tpu_custom_call.1} parent=5 // pred_check_branch
        %141 = sbr.rel (%p138) target = $region28
      $region27: #{tpu_custom_call.1} parent=5 // pred_region
        %s142 = ssub.s32 %s15, 1
        // Predicated region
        $region29: #{tpu_custom_call.1} parent=27 // pred_check
          %p143 = pneg %p36
        $region30: #{tpu_custom_call.1} parent=27 // pred_check_branch
          %145 = sbr.rel (%p143) target = $region32
        $region31: #{tpu_custom_call.1} parent=27 // pred_region
          %146 = dma.done [#allocation3], 128
        $region32: #{tpu_custom_call.1} parent=27 // pred_fallthru
          _
        %s147 = sand.u32 %s49, 1
        %s148 = scalar_lea.sflag [#allocation6], %s147
        %s149 = sand.u32 %s49, 1
        %s150 = smul.addr %s149, 8
        %s151 = scalar_lea.vmem [#allocation5], %s150
        // Predicated region
        $region33: #{tpu_custom_call.1} parent=27 // pred_check
          %p152 = pneg %p62
        $region34: #{tpu_custom_call.1} parent=27 // pred_check_branch
          %154 = sbr.rel (%p152) target = $region36
        $region35: #{tpu_custom_call.1} parent=27 // pred_region
          %155 = dma.done %s148, 128
        $region36: #{tpu_custom_call.1} parent=27 // pred_fallthru
          _
        %p156 = pneg %p36
        %p157 = pneg %p33
        %s158 = sand.u32 %s49, 1
        %s159 = scalar_lea.sflag [#allocation6], %s158
        %s160 = sand.u32 %s49, 1
        %s161 = smul.addr %s160, 8
        %s162 = scalar_lea.vmem [#allocation5], %s161
        %p163 = pneg %p62
        %p164 = pneg %p59
        %p165 = pneg %p88
        %p166 = pneg %p85
        %s167 = sand.u32 %s75, 1
        %s168 = scalar_lea.sflag [#allocation4], %s167
        %s169 = sand.u32 %s75, 1
        %s170 = smul.addr %s169, 8
        %s171 = scalar_lea.vmem [#allocation7], %s170
        %v172 = vld [vmem:[%s151] sm:$0xff]
        %v173 = vld [vmem:[#allocation2] sm:$0xff]
        %v174 = vadd.f32 %v172, %v173
        %175 = vst [vmem:[%s171] sm:$0xff] %v174
        %s176 = sand.u32 %s75, 1
        %s177 = scalar_lea.sflag [#allocation4], %s176
        %s178 = sand.u32 %s75, 1
        %s179 = smul.addr %s178, 8
        %s180 = scalar_lea.vmem [#allocation7], %s179
        // Predicated region
        $region37: #{tpu_custom_call.1} parent=27 // pred_check
          %p181 = pneg %p85
        $region38: #{tpu_custom_call.1} parent=27 // pred_check_branch
          %183 = sbr.rel (%p181) target = $region40
        $region39: #{tpu_custom_call.1} parent=27 // pred_region
          %s185 = ssub.s32 128, 128
          %186 = vsyncadd %s177, %s185
          %s187 = smul.addr %s20, 128
          %s188 = scalar_lea.hbm %s2, %s187
          %s190 = sshll.u32 %s180, 4
          %s191 = int_to_ptr.vmem [resolvable:$true] %s190
          %193 = dma.vmem_to_hbm [thread:$0]  %s191, 128, %s188, %s177
        $region40: #{tpu_custom_call.1} parent=27 // pred_fallthru
          _
      $region28: #{tpu_custom_call.1} parent=5 // pred_fallthru
        _
      %p194 = scmp.le.s32.totalorder 2, %s15
      // Predicated region
      $region41: #{tpu_custom_call.1} parent=5 // pred_check
        %p195 = pneg %p194
      $region42: #{tpu_custom_call.1} parent=5 // pred_check_branch
        %197 = sbr.rel (%p195) target = $region44
      $region43: #{tpu_custom_call.1} parent=5 // pred_region
        %s198 = ssub.s32 %s15, 2
        // Predicated region
        $region45: #{tpu_custom_call.1} parent=43 // pred_check
          %p199 = pneg %p91
        $region46: #{tpu_custom_call.1} parent=43 // pred_check_branch
          %201 = sbr.rel (%p199) target = $region48
        $region47: #{tpu_custom_call.1} parent=43 // pred_region
          %s202 = sand.u32 %s76, 1
          %s203 = scalar_lea.sflag [#allocation4], %s202
          %s204 = sand.u32 %s76, 1
          %s205 = smul.addr %s204, 8
          %s206 = scalar_lea.vmem [#allocation7], %s205
          %207 = dma.done %s203, 128
        $region48: #{tpu_custom_call.1} parent=43 // pred_fallthru
          _
      $region44: #{tpu_custom_call.1} parent=5 // pred_fallthru
        _
    $region6: #{tpu_custom_call.1} parent=1 // loop_footer
      %s19 = sadd.s32 1, %s15
    $region7: #{tpu_custom_call.1} parent=1 // loop_footer_branch
      %14 = sbr.rel target = $region3
    $region8: #{tpu_custom_call.1} parent=1 // loop_exit
      _
    %208 = vsyncpa [#allocation3], 1
    %s209 = scalar_lea.sflag [#allocation3], 1
    %210 = vsyncpa %s209, 1
    %211 = vsyncpa [#allocation6], 1
    %s212 = scalar_lea.sflag [#allocation6], 1
    %213 = vsyncpa %s212, 1
    %214 = vsyncpa [#allocation4], 1
    %s215 = scalar_lea.sflag [#allocation4], 1
    %216 = vsyncpa %s215, 1

// kernel: tpu_custom_call.1
$region0: #{tpu_custom_call.1}
  #allocation0 [shape = 'u32[]', space=smem, size = 0x4, offset = 0x4, fixed_abs, tag = 'smem constant byte address 0x4 - core index']
  #allocation1 [shape = 'u32[144,128]{1,0:T(1,128)}', space=vmem, size = 0x12000, scoped, tag = 'internal scratch']
  %s0 = inlined_call_operand.hbm [shape: f32[2,8,32], index: 0, kind: input, shape index: {}]
  %s1 = inlined_call_operand.hbm [shape: bf16[32,32], index: 1, kind: input, shape index: {}]
  %s2 = inlined_call_operand.vmem [shape: f32[1,32], index: 2, kind: input, shape index: {}]
  %s3 = inlined_call_operand.hbm [shape: bf16[32,64], index: 3, kind: input, shape index: {}]
  %s4 = inlined_call_operand.vmem [shape: f32[1,64], index: 4, kind: input, shape index: {}]
  %s5 = inlined_call_operand.hbm [shape: f32[2,8,32], index: 5, kind: output, shape index: {0}]
  %s6 = inlined_call_operand.hbm [shape: f32[2,8,64], index: 6, kind: output, shape index: {1}]
  %7 = xla_tuple %s5, %s6
  %s8 = sld [smem:[#allocation0]]
  $region73: #{tpu_custom_call.1} parent=0
    _
  %s10 = ssub.s32 1, %s8
  %s11 = scalar_select 0, %s10, %s8
  $region1: #{tpu_custom_call.1} parent=0
    #allocation2 [shape = 'u8[8192]{0}', space=vmem, size = 0x2000, scoped, tag = 'input window, operand 0']
    #allocation3 [shape = 's32[2]{0}', space=sflag, size = 0x8, scoped, tag = 'scoped memory for tpu_custom_call.1']
    #allocation4 [shape = 's32[2]{0}', space=sflag, size = 0x8, scoped, tag = 'scoped memory for tpu_custom_call.1']
    #allocation5 [shape = 'u8[8192]{0}', space=vmem, size = 0x2000, scoped, tag = 'input window, operand 1, single buffered']
    #allocation6 [shape = 's32[1]{0}', space=sflag, size = 0x4, scoped, tag = 'scoped memory for tpu_custom_call.1']
    #allocation7 [shape = 'u8[8192]{0}', space=vmem, size = 0x2000, scoped, tag = 'input window, operand 3, single buffered']
    #allocation8 [shape = 'u8[8192]{0}', space=vmem, size = 0x2000, scoped, tag = 'output window, operand 0']
    #allocation9 [shape = 'u8[8192]{0}', space=vmem, size = 0x2000, scoped, tag = 'output window, operand 1']
    #allocation10 [shape = 's32[2]{0}', space=sflag, size = 0x8, scoped, tag = 'scoped memory for tpu_custom_call.1']
    %12 = vsyncpa [#allocation3], 0
    %s13 = scalar_lea.sflag [#allocation3], 1
    %14 = vsyncpa %s13, 0
    %15 = vsyncpa [#allocation6], 0
    %16 = vsyncpa [#allocation4], 0
    %s17 = scalar_lea.sflag [#allocation4], 1
    %18 = vsyncpa %s17, 0
    %19 = vsyncpa [#allocation10], 0
    %s20 = scalar_lea.sflag [#allocation10], 1
    %21 = vsyncpa %s20, 0
    loop: start=0, step=1, limit=4
    $region2: #{tpu_custom_call.1} parent=1 // loop_pre_header
      _
    $region3: #{tpu_custom_call.1} parent=1 // loop_header
      %s23 = sphi 0, %s27
      %p24 = scmp.ge.s32.totalorder %s23, 4
      %s30 = sphi 0, %s42
      %s31 = sphi 0, %s38
      %s32 = sphi 0, %s30
      %s33 = sphi 0, %s31
      %s34 = sphi 0, %s32
      %s35 = sphi 0, %s33
      %s47 = sphi 0, %s49
      %s50 = sphi 0, %s47
      %s51 = sphi 0, %s50
      %s67 = sphi 0, %s51
      %s71 = sphi 0, %s71
      %s73 = sphi 0, %s71
      %s74 = sphi 0, %s73
      %s88 = sphi 0, %s74
      %s92 = sphi 0, %s92
      %s94 = sphi 0, %s92
      %s95 = sphi 0, %s94
      %s109 = sphi 0, %s95
      %s113 = sphi 0, %s113
      %s115 = sphi 0, %s113
      %s116 = sphi 0, %s115
      %s130 = sphi 0, %s116
      %s134 = sphi 0, %s134
      %s136 = sphi 0, %s134
      %s137 = sphi 0, %s136
      %s151 = sphi 0, %s137
      %s159 = sphi 0, %s161
      %s162 = sphi 0, %s159
      %s163 = sphi 0, %s162
      %s179 = sphi 0, %s163
      %s187 = sphi 0, %s189
      %s190 = sphi 0, %s187
      %s191 = sphi 0, %s190
      %s207 = sphi 0, %s191
    $region4: #{tpu_custom_call.1} parent=1 // loop_header_branch
      %26 = sbr.rel (%p24) target = $region8
    $region5: #{tpu_custom_call.1} parent=1 // loop_body
      %s28 = ssub.s32 %s23, 1
      %s29 = ssub.s32 %s23, 2
      %s36 = sadd.s32 1, %s31
      %p37 = scmp.ge.s32.totalorder %s36, 1
      %s38 = scalar_select %p37, 0, %s36
      %s39 = sadd.s32 1, %s30
      %s40 = scalar_select %p37, %s39, %s30
      %p41 = scmp.ge.s32.totalorder %s40, 2
      %s42 = scalar_select %p41, 0, %s40
      %s43 = ssub.s32 %s30, %s42
      %s44 = ssub.s32 %s31, %s38
      %s45 = sor.u32 %s43, %s44
      %p46 = scmp.eq.s32.totalorder %s45, 0
      %s48 = sadd.s32 %s47, 1
      %s49 = scalar_select %p46, %s47, %s48
      %p52 = pneg %p46
      %p53 = scmp.eq.s32.totalorder %s23, 1
      %p54 = por %p52, %p53
      %p55 = scmp.ne.s32.totalorder %s47, %s50
      %p56 = scmp.eq.s32.totalorder %s23, 0
      %p57 = por %p55, %p56
      %p58 = scmp.ne.s32.totalorder %s47, %s50
      %p59 = scmp.eq.s32.totalorder %s28, 1
      %p60 = por %p58, %p59
      %p61 = scmp.ne.s32.totalorder %s50, %s51
      %p62 = scmp.eq.s32.totalorder %s28, 0
      %p63 = por %p61, %p62
      %p64 = scmp.ne.s32.totalorder %s50, %s51
      %p65 = scmp.eq.s32.totalorder %s29, 1
      %p66 = por %p64, %p65
      %p68 = scmp.ne.s32.totalorder %s51, %s67
      %p69 = scmp.eq.s32.totalorder %s29, 0
      %p70 = por %p68, %p69
      %s72 = sadd.s32 %s71, 1
      %p75 = scmp.eq.s32.totalorder %s23, 1
      %p76 = scmp.ne.s32.totalorder %s71, %s73
      %p77 = scmp.eq.s32.totalorder %s23, 0
      %p78 = por %p76, %p77
      %p79 = scmp.ne.s32.totalorder %s71, %s73
      %p80 = scmp.eq.s32.totalorder %s28, 1
      %p81 = por %p79, %p80
      %p82 = scmp.ne.s32.totalorder %s73, %s74
      %p83 = scmp.eq.s32.totalorder %s28, 0
      %p84 = por %p82, %p83
      %p85 = scmp.ne.s32.totalorder %s73, %s74
      %p86 = scmp.eq.s32.totalorder %s29, 1
      %p87 = por %p85, %p86
      %p89 = scmp.ne.s32.totalorder %s74, %s88
      %p90 = scmp.eq.s32.totalorder %s29, 0
      %p91 = por %p89, %p90
      %s93 = sadd.s32 %s92, 1
      %p96 = scmp.eq.s32.totalorder %s23, 1
      %p97 = scmp.ne.s32.totalorder %s92, %s94
      %p98 = scmp.eq.s32.totalorder %s23, 0
      %p99 = por %p97, %p98
      %p100 = scmp.ne.s32.totalorder %s92, %s94
      %p101 = scmp.eq.s32.totalorder %s28, 1
      %p102 = por %p100, %p101
      %p103 = scmp.ne.s32.totalorder %s94, %s95
      %p104 = scmp.eq.s32.totalorder %s28, 0
      %p105 = por %p103, %p104
      %p106 = scmp.ne.s32.totalorder %s94, %s95
      %p107 = scmp.eq.s32.totalorder %s29, 1
      %p108 = por %p106, %p107
      %p110 = scmp.ne.s32.totalorder %s95, %s109
      %p111 = scmp.eq.s32.totalorder %s29, 0
      %p112 = por %p110, %p111
      %s114 = sadd.s32 %s113, 1
      %p117 = scmp.eq.s32.totalorder %s23, 1
      %p118 = scmp.ne.s32.totalorder %s113, %s115
      %p119 = scmp.eq.s32.totalorder %s23, 0
      %p120 = por %p118, %p119
      %p121 = scmp.ne.s32.totalorder %s113, %s115
      %p122 = scmp.eq.s32.totalorder %s28, 1
      %p123 = por %p121, %p122
      %p124 = scmp.ne.s32.totalorder %s115, %s116
      %p125 = scmp.eq.s32.totalorder %s28, 0
      %p126 = por %p124, %p125
      %p127 = scmp.ne.s32.totalorder %s115, %s116
      %p128 = scmp.eq.s32.totalorder %s29, 1
      %p129 = por %p127, %p128
      %p131 = scmp.ne.s32.totalorder %s116, %s130
      %p132 = scmp.eq.s32.totalorder %s29, 0
      %p133 = por %p131, %p132
      %s135 = sadd.s32 %s134, 1
      %p138 = scmp.eq.s32.totalorder %s23, 1
      %p139 = scmp.ne.s32.totalorder %s134, %s136
      %p140 = scmp.eq.s32.totalorder %s23, 0
      %p141 = por %p139, %p140
      %p142 = scmp.ne.s32.totalorder %s134, %s136
      %p143 = scmp.eq.s32.totalorder %s28, 1
      %p144 = por %p142, %p143
      %p145 = scmp.ne.s32.totalorder %s136, %s137
      %p146 = scmp.eq.s32.totalorder %s28, 0
      %p147 = por %p145, %p146
      %p148 = scmp.ne.s32.totalorder %s136, %s137
      %p149 = scmp.eq.s32.totalorder %s29, 1
      %p150 = por %p148, %p149
      %p152 = scmp.ne.s32.totalorder %s137, %s151
      %p153 = scmp.eq.s32.totalorder %s29, 0
      %p154 = por %p152, %p153
      %s155 = ssub.s32 %s30, %s42
      %s156 = ssub.s32 %s31, %s38
      %s157 = sor.u32 %s155, %s156
      %p158 = scmp.eq.s32.totalorder %s157, 0
      %s160 = sadd.s32 %s159, 1
      %s161 = scalar_select %p158, %s159, %s160
      %p164 = pneg %p158
      %p165 = scmp.eq.s32.totalorder %s23, 1
      %p166 = por %p164, %p165
      %p167 = scmp.ne.s32.totalorder %s159, %s162
      %p168 = scmp.eq.s32.totalorder %s23, 0
      %p169 = por %p167, %p168
      %p170 = scmp.ne.s32.totalorder %s159, %s162
      %p171 = scmp.eq.s32.totalorder %s28, 1
      %p172 = por %p170, %p171
      %p173 = scmp.ne.s32.totalorder %s162, %s163
      %p174 = scmp.eq.s32.totalorder %s28, 0
      %p175 = por %p173, %p174
      %p176 = scmp.ne.s32.totalorder %s162, %s163
      %p177 = scmp.eq.s32.totalorder %s29, 1
      %p178 = por %p176, %p177
      %p180 = scmp.ne.s32.totalorder %s163, %s179
      %p181 = scmp.eq.s32.totalorder %s29, 0
      %p182 = por %p180, %p181
      %s183 = ssub.s32 %s30, %s42
      %s184 = ssub.s32 %s31, %s38
      %s185 = sor.u32 %s183, %s184
      %p186 = scmp.eq.s32.totalorder %s185, 0
      %s188 = sadd.s32 %s187, 1
      %s189 = scalar_select %p186, %s187, %s188
      %p192 = pneg %p186
      %p193 = scmp.eq.s32.totalorder %s23, 1
      %p194 = por %p192, %p193
      %p195 = scmp.ne.s32.totalorder %s187, %s190
      %p196 = scmp.eq.s32.totalorder %s23, 0
      %p197 = por %p195, %p196
      %p198 = scmp.ne.s32.totalorder %s187, %s190
      %p199 = scmp.eq.s32.totalorder %s28, 1
      %p200 = por %p198, %p199
      %p201 = scmp.ne.s32.totalorder %s190, %s191
      %p202 = scmp.eq.s32.totalorder %s28, 0
      %p203 = por %p201, %p202
      %p204 = scmp.ne.s32.totalorder %s190, %s191
      %p205 = scmp.eq.s32.totalorder %s29, 1
      %p206 = por %p204, %p205
      %p208 = scmp.ne.s32.totalorder %s191, %s207
      %p209 = scmp.eq.s32.totalorder %s29, 0
      %p210 = por %p208, %p209
      %p211 = scmp.le.s32.totalorder 1, %s23
      %p212 = scmp.lt.s32.totalorder %s23, 3
      %p213 = pnand %p211, %p212
      %p214 = pneg %p213
      // Predicated region
      $region9: #{tpu_custom_call.1} parent=5 // pred_check
        _
      $region10: #{tpu_custom_call.1} parent=5 // pred_check_branch
        %216 = sbr.rel (%p213) target = $region12
      $region11: #{tpu_custom_call.1} parent=5 // pred_region
        %s217 = ssub.s32 %s23, 1
        // Predicated region
        $region13: #{tpu_custom_call.1} parent=11 // pred_check
          %p218 = pneg %p84
        $region14: #{tpu_custom_call.1} parent=11 // pred_check_branch
          %220 = sbr.rel (%p218) target = $region16
        $region15: #{tpu_custom_call.1} parent=11 // pred_region
          %s222 = ssub.s32 256, 256
          %223 = vsyncadd [#allocation6], %s222
          %s224 = sshll.u32 [#allocation5], 4
          %s225 = int_to_ptr.vmem [resolvable:$true] %s224
          %230 = dma.hbm_to_vmem [thread:$0]  %s1, 256, %s225, [#allocation6], 64, 64, 4
        $region16: #{tpu_custom_call.1} parent=11 // pred_fallthru
          _
        // Predicated region
        $region17: #{tpu_custom_call.1} parent=11 // pred_check
          %p231 = pneg %p105
        $region18: #{tpu_custom_call.1} parent=11 // pred_check_branch
          %233 = sbr.rel (%p231) target = $region20
        $region19: #{tpu_custom_call.1} parent=11 // pred_region
          _
        $region20: #{tpu_custom_call.1} parent=11 // pred_fallthru
          _
        // Predicated region
        $region21: #{tpu_custom_call.1} parent=11 // pred_check
          %p234 = pneg %p126
        $region22: #{tpu_custom_call.1} parent=11 // pred_check_branch
          %236 = sbr.rel (%p234) target = $region24
        $region23: #{tpu_custom_call.1} parent=11 // pred_region
          %s238 = ssub.s32 256, 256
          %239 = vsyncadd [#allocation6], %s238
          %s240 = sshll.u32 [#allocation7], 4
          %s241 = int_to_ptr.vmem [resolvable:$true] %s240
          %246 = dma.hbm_to_vmem [thread:$0]  %s3, 256, %s241, [#allocation6], 64, 64, 4
        $region24: #{tpu_custom_call.1} parent=11 // pred_fallthru
          _
        // Predicated region
        $region25: #{tpu_custom_call.1} parent=11 // pred_check
          %p247 = pneg %p147
        $region26: #{tpu_custom_call.1} parent=11 // pred_check_branch
          %249 = sbr.rel (%p247) target = $region28
        $region27: #{tpu_custom_call.1} parent=11 // pred_region
          _
        $region28: #{tpu_custom_call.1} parent=11 // pred_fallthru
          _
      $region12: #{tpu_custom_call.1} parent=5 // pred_fallthru
        _
      %p250 = scmp.lt.s32.totalorder %s23, 2
      // Predicated region
      $region29: #{tpu_custom_call.1} parent=5 // pred_check
        %p251 = pneg %p250
      $region30: #{tpu_custom_call.1} parent=5 // pred_check_branch
        %253 = sbr.rel (%p251) target = $region32
      $region31: #{tpu_custom_call.1} parent=5 // pred_region
        // Predicated region
        $region33: #{tpu_custom_call.1} parent=31 // pred_check
          %p254 = pneg %p57
        $region34: #{tpu_custom_call.1} parent=31 // pred_check_branch
          %256 = sbr.rel (%p254) target = $region36
        $region35: #{tpu_custom_call.1} parent=31 // pred_region
          %s257 = sand.u32 %s47, 1
          %s258 = scalar_lea.sflag [#allocation3], %s257
          %s259 = sand.u32 %s47, 1
          %s260 = smul.addr %s259, 8
          %s261 = scalar_lea.vmem [#allocation2], %s260
          %s263 = ssub.s32 128, 128
          %264 = vsyncadd %s258, %s263
          %s265 = sadd.s32 %s31, %s30
          %s266 = smul.addr %s265, 128
          %s267 = scalar_lea.hbm %s0, %s266
          %s269 = sshll.u32 %s261, 4
          %s270 = int_to_ptr.vmem [resolvable:$true] %s269
          %272 = dma.hbm_to_vmem [thread:$0]  %s267, 128, %s270, %s258
        $region36: #{tpu_custom_call.1} parent=31 // pred_fallthru
          _
      $region32: #{tpu_custom_call.1} parent=5 // pred_fallthru
        _
      %p273 = scmp.le.s32.totalorder 1, %s23
      %p274 = scmp.lt.s32.totalorder %s23, 3
      %p275 = pnand %p273, %p274
      %p276 = pneg %p275
      // Predicated region
      $region37: #{tpu_custom_call.1} parent=5 // pred_check
        _
      $region38: #{tpu_custom_call.1} parent=5 // pred_check_branch
        %278 = sbr.rel (%p275) target = $region40
      $region39: #{tpu_custom_call.1} parent=5 // pred_region
        %s279 = ssub.s32 %s23, 1
        %s280 = sand.u32 %s50, 1
        %s281 = scalar_lea.sflag [#allocation3], %s280
        %s282 = sand.u32 %s50, 1
        %s283 = smul.addr %s282, 8
        %s284 = scalar_lea.vmem [#allocation2], %s283
        // Predicated region
        $region41: #{tpu_custom_call.1} parent=39 // pred_check
          %p285 = pneg %p63
        $region42: #{tpu_custom_call.1} parent=39 // pred_check_branch
          %287 = sbr.rel (%p285) target = $region44
        $region43: #{tpu_custom_call.1} parent=39 // pred_region
          %288 = dma.done %s281, 128
        $region44: #{tpu_custom_call.1} parent=39 // pred_fallthru
          _
        // Predicated region
        $region45: #{tpu_custom_call.1} parent=39 // pred_check
          %p289 = pneg %p84
        $region46: #{tpu_custom_call.1} parent=39 // pred_check_branch
          %291 = sbr.rel (%p289) target = $region48
        $region47: #{tpu_custom_call.1} parent=39 // pred_region
          %292 = dma.done [#allocation6], 256
        $region48: #{tpu_custom_call.1} parent=39 // pred_fallthru
          _
        // Predicated region
        $region49: #{tpu_custom_call.1} parent=39 // pred_check
          %p293 = pneg %p126
        $region50: #{tpu_custom_call.1} parent=39 // pred_check_branch
          %295 = sbr.rel (%p293) target = $region52
        $region51: #{tpu_custom_call.1} parent=39 // pred_region
          %296 = dma.done [#allocation6], 256
        $region52: #{tpu_custom_call.1} parent=39 // pred_fallthru
          _
        %s297 = sand.u32 %s50, 1
        %s298 = scalar_lea.sflag [#allocation3], %s297
        %s299 = sand.u32 %s50, 1
        %s300 = smul.addr %s299, 8
        %s301 = scalar_lea.vmem [#allocation2], %s300
        %p302 = pneg %p63
        %p303 = pneg %p60
        %p304 = pneg %p84
        %p305 = pneg %p81
        %p306 = pneg %p105
        %p307 = pneg %p102
        %p308 = pneg %p126
        %p309 = pneg %p123
        %p310 = pneg %p147
        %p311 = pneg %p144
        %p312 = pneg %p175
        %p313 = pneg %p172
        %s314 = sand.u32 %s162, 1
        %s315 = scalar_lea.sflag [#allocation4], %s314
        %s316 = sand.u32 %s162, 1
        %s317 = smul.addr %s316, 8
        %s318 = scalar_lea.vmem [#allocation8], %s317
        %p319 = pneg %p203
        %p320 = pneg %p200
        %s321 = sand.u32 %s190, 1
        %s322 = scalar_lea.sflag [#allocation10], %s321
        %s323 = sand.u32 %s190, 1
        %s324 = smul.addr %s323, 8
        %s325 = scalar_lea.vmem [#allocation9], %s324
        %v327 = vld [vmem:[%s284] sm:$0xff]
        %v328 = vpack.c.bf16 %v327, %v327
        %v329 = vld [vmem:[#allocation5] sm:$0xf]
        %v330 = vld [vmem:[#allocation5 + $0x4] sm:$0xf]
        %v331 = vld [vmem:[#allocation5 + $0x8] sm:$0xf]
        %v332 = vld [vmem:[#allocation5 + $0xc] sm:$0xf]
        %v333 = vld [vmem:[%s2] sm:$0x1]
        %v335 = vlaneseq
        %v336 = vshrl.u32 %v335, 7
        %v337 = vsub.s32 0, %v336
        %v338 = vrot.slane %v333, %v337
        %v344 = vunpack.c.l.b16 %v329
        %v345 = vunpack.c.l.b16 %v330
        %v346 = vunpack.c.l.b16 %v331
        %v347 = vunpack.c.l.b16 %v332
        %v348 = vpack.c.b16 %v345, %v344
        %v349 = vpack.c.b16 %v347, %v346
        %vm352 = vcmask 261120
        %v354 = vsel %vm352, %v328, 0
        %356 = vmatprep.subr.bf16.mxu0 0
        %357 = vmatpush1.bf16.msra.mxu0 %v348
        %358 = vmatprep.subr.bf16.mxu0 0
        %359 = vmatpush1.bf16.msra.mxu0 %v349
        %360 = vmatprep.subr.bf16.mxu0 0
        %361 = vmatpush1.bf16.msra.mxu0 0
        %362 = vmatprep.subr.bf16.mxu0 0
        %363 = vmatpush1.bf16.msra.mxu0 0
        %364 = vmatprep.subr.bf16.mxu0 0
        %365 = vmatpush1.bf16.msra.mxu0 0
        %366 = vmatprep.subr.bf16.mxu0 0
        %367 = vmatpush1.bf16.msra.mxu0 0
        %368 = vmatprep.subr.bf16.mxu0 0
        %369 = vmatpush1.bf16.msra.mxu0 0
        %370 = vmatprep.subr.bf16.mxu0 0
        %371 = vmatpush1.bf16.msra.mxu0 0
        %372 = vmatprep.subr.bf16.mxu0 0
        %373 = vmatpush1.bf16.msra.mxu0 0
        %374 = vmatprep.subr.bf16.mxu0 0
        %375 = vmatpush1.bf16.msra.mxu0 0
        %376 = vmatprep.subr.bf16.mxu0 0
        %377 = vmatpush1.bf16.msra.mxu0 0
        %378 = vmatprep.subr.bf16.mxu0 0
        %379 = vmatpush1.bf16.msra.mxu0 0
        %380 = vmatprep.subr.bf16.mxu0 0
        %381 = vmatpush1.bf16.msra.mxu0 0
        %382 = vmatprep.subr.bf16.mxu0 0
        %383 = vmatpush1.bf16.msra.mxu0 0
        %384 = vmatprep.subr.bf16.mxu0 0
        %385 = vmatpush1.bf16.msra.mxu0 0
        %386 = vmatprep.subr.bf16.mxu0 0
        %387 = vmatpush1.bf16.msra.mxu0 0
        %388 = vmatprep.mubr.bf16.mxu0 0
        %389 = vmatmul.mubr.bf16.gmra.mrb[0].mxu0 %v354
        %v390 = vpop.f32.mrb[0].mxu0
        %v391 = vadd.f32 %v338, %v390
        %v392 = vpop.f32.mrb[0].mxu0
        %v393 = vpop.f32.mrb[0].mxu0
        %v394 = vpop.f32.mrb[0].mxu0
        %395 = vdwg.mxu0
        %v396 = vld [vmem:[#allocation7] sm:$0xf]
        %v397 = vld [vmem:[#allocation7 + $0x4] sm:$0xf]
        %v398 = vld [vmem:[#allocation7 + $0x8] sm:$0xf]
        %v399 = vld [vmem:[#allocation7 + $0xc] sm:$0xf]
        %v400 = vld [vmem:[%s4] sm:$0x1]
        %v402 = vlaneseq
        %v403 = vshrl.u32 %v402, 7
        %v404 = vsub.s32 0, %v403
        %v405 = vrot.slane %v400, %v404
        %v411 = vunpack.c.l.b16 %v396
        %v412 = vunpack.c.l.b16 %v397
        %v413 = vunpack.c.l.b16 %v398
        %v414 = vunpack.c.l.b16 %v399
        %v415 = vpack.c.b16 %v412, %v411
        %v416 = vpack.c.b16 %v414, %v413
        %419 = vmatprep.subr.bf16.mxu0 0
        %420 = vmatpush1.bf16.msra.mxu0 %v415
        %421 = vmatprep.subr.bf16.mxu0 0
        %422 = vmatpush1.bf16.msra.mxu0 %v416
        %423 = vmatprep.subr.bf16.mxu0 0
        %424 = vmatpush1.bf16.msra.mxu0 0
        %425 = vmatprep.subr.bf16.mxu0 0
        %426 = vmatpush1.bf16.msra.mxu0 0
        %427 = vmatprep.subr.bf16.mxu0 0
        %428 = vmatpush1.bf16.msra.mxu0 0
        %429 = vmatprep.subr.bf16.mxu0 0
        %430 = vmatpush1.bf16.msra.mxu0 0
        %431 = vmatprep.subr.bf16.mxu0 0
        %432 = vmatpush1.bf16.msra.mxu0 0
        %433 = vmatprep.subr.bf16.mxu0 0
        %434 = vmatpush1.bf16.msra.mxu0 0
        %435 = vmatprep.subr.bf16.mxu0 0
        %436 = vmatpush1.bf16.msra.mxu0 0
        %437 = vmatprep.subr.bf16.mxu0 0
        %438 = vmatpush1.bf16.msra.mxu0 0
        %439 = vmatprep.subr.bf16.mxu0 0
        %440 = vmatpush1.bf16.msra.mxu0 0
        %441 = vmatprep.subr.bf16.mxu0 0
        %442 = vmatpush1.bf16.msra.mxu0 0
        %443 = vmatprep.subr.bf16.mxu0 0
        %444 = vmatpush1.bf16.msra.mxu0 0
        %445 = vmatprep.subr.bf16.mxu0 0
        %446 = vmatpush1.bf16.msra.mxu0 0
        %447 = vmatprep.subr.bf16.mxu0 0
        %448 = vmatpush1.bf16.msra.mxu0 0
        %449 = vmatprep.subr.bf16.mxu0 0
        %450 = vmatpush1.bf16.msra.mxu0 0
        %451 = vmatprep.mubr.bf16.mxu0 0
        %452 = vmatmul.mubr.bf16.gmra.mrb[0].mxu0 %v354
        %v453 = vpop.f32.mrb[0].mxu0
        %v454 = vadd.f32 %v405, %v453
        %v455 = vpop.f32.mrb[0].mxu0
        %v456 = vpop.f32.mrb[0].mxu0
        %v457 = vpop.f32.mrb[0].mxu0
        %458 = vdwg.mxu0
        %459 = vst.msk [vmem:[%s318] sm:$0xff] %vm352, %v391
        %vm460 = vcmask 523264
        %461 = vst.msk [vmem:[%s325] sm:$0xff] %vm460, %v454
        %s462 = sand.u32 %s162, 1
        %s463 = scalar_lea.sflag [#allocation4], %s462
        %s464 = sand.u32 %s162, 1
        %s465 = smul.addr %s464, 8
        %s466 = scalar_lea.vmem [#allocation8], %s465
        %s467 = sand.u32 %s190, 1
        %s468 = scalar_lea.sflag [#allocation10], %s467
        %s469 = sand.u32 %s190, 1
        %s470 = smul.addr %s469, 8
        %s471 = scalar_lea.vmem [#allocation9], %s470
        // Predicated region
        $region53: #{tpu_custom_call.1} parent=39 // pred_check
          %p472 = pneg %p172
        $region54: #{tpu_custom_call.1} parent=39 // pred_check_branch
          %474 = sbr.rel (%p472) target = $region56
        $region55: #{tpu_custom_call.1} parent=39 // pred_region
          %s476 = ssub.s32 128, 128
          %477 = vsyncadd %s463, %s476
          %s478 = sadd.s32 %s33, %s32
          %s479 = smul.addr %s478, 128
          %s480 = scalar_lea.hbm %s5, %s479
          %s482 = sshll.u32 %s466, 4
          %s483 = int_to_ptr.vmem [resolvable:$true] %s482
          %485 = dma.vmem_to_hbm [thread:$0]  %s483, 128, %s480, %s463
        $region56: #{tpu_custom_call.1} parent=39 // pred_fallthru
          _
        // Predicated region
        $region57: #{tpu_custom_call.1} parent=39 // pred_check
          %p486 = pneg %p200
        $region58: #{tpu_custom_call.1} parent=39 // pred_check_branch
          %488 = sbr.rel (%p486) target = $region60
        $region59: #{tpu_custom_call.1} parent=39 // pred_region
          %s490 = ssub.s32 128, 128
          %491 = vsyncadd %s468, %s490
          %s492 = sadd.s32 %s33, %s32
          %s493 = smul.addr %s492, 128
          %s494 = scalar_lea.hbm %s6, %s493
          %s496 = sshll.u32 %s471, 4
          %s497 = int_to_ptr.vmem [resolvable:$true] %s496
          %499 = dma.vmem_to_hbm [thread:$0]  %s497, 128, %s494, %s468
        $region60: #{tpu_custom_call.1} parent=39 // pred_fallthru
          _
      $region40: #{tpu_custom_call.1} parent=5 // pred_fallthru
        _
      %p500 = scmp.le.s32.totalorder 2, %s23
      // Predicated region
      $region61: #{tpu_custom_call.1} parent=5 // pred_check
        %p501 = pneg %p500
      $region62: #{tpu_custom_call.1} parent=5 // pred_check_branch
        %503 = sbr.rel (%p501) target = $region64
      $region63: #{tpu_custom_call.1} parent=5 // pred_region
        %s504 = ssub.s32 %s23, 2
        // Predicated region
        $region65: #{tpu_custom_call.1} parent=63 // pred_check
          %p505 = pneg %p178
        $region66: #{tpu_custom_call.1} parent=63 // pred_check_branch
          %507 = sbr.rel (%p505) target = $region68
        $region67: #{tpu_custom_call.1} parent=63 // pred_region
          %s508 = sand.u32 %s163, 1
          %s509 = scalar_lea.sflag [#allocation4], %s508
          %s510 = sand.u32 %s163, 1
          %s511 = smul.addr %s510, 8
          %s512 = scalar_lea.vmem [#allocation8], %s511
          %513 = dma.done %s509, 128
        $region68: #{tpu_custom_call.1} parent=63 // pred_fallthru
          _
        // Predicated region
        $region69: #{tpu_custom_call.1} parent=63 // pred_check
          %p514 = pneg %p206
        $region70: #{tpu_custom_call.1} parent=63 // pred_check_branch
          %516 = sbr.rel (%p514) target = $region72
        $region71: #{tpu_custom_call.1} parent=63 // pred_region
          %s517 = sand.u32 %s191, 1
          %s518 = scalar_lea.sflag [#allocation10], %s517
          %s519 = sand.u32 %s191, 1
          %s520 = smul.addr %s519, 8
          %s521 = scalar_lea.vmem [#allocation9], %s520
          %522 = dma.done %s518, 128
        $region72: #{tpu_custom_call.1} parent=63 // pred_fallthru
          _
      $region64: #{tpu_custom_call.1} parent=5 // pred_fallthru
        _
    $region6: #{tpu_custom_call.1} parent=1 // loop_footer
      %s27 = sadd.s32 1, %s23
    $region7: #{tpu_custom_call.1} parent=1 // loop_footer_branch
      %22 = sbr.rel target = $region3
    $region8: #{tpu_custom_call.1} parent=1 // loop_exit
      _
    %523 = vsyncpa [#allocation3], 1
    %s524 = scalar_lea.sflag [#allocation3], 1
    %525 = vsyncpa %s524, 1
    %526 = vsyncpa [#allocation6], 1
    %527 = vsyncpa [#allocation4], 1
    %s528 = scalar_lea.sflag [#allocation4], 1
    %529 = vsyncpa %s528, 1
    %530 = vsyncpa [#allocation10], 1
    %s531 = scalar_lea.sflag [#allocation10], 1
    %532 = vsyncpa %s531, 1

</llo_original>
